<compile_context>
chip_gen: v5e
topology: v5e:2x2
jax: 0.10.0
libtpu: 0.0.40
codegen_flags: <defaults>
</compile_context>

<pallas_src>
import jax
import jax.numpy as jnp
from jax import lax
from jax.experimental import pallas as pl
from jax.experimental.pallas import tpu as pltpu

LANES = 512  # lane-dense last dim (4 vregs wide)


def _cdiv(a, b):
    return -(-a // b)


def _round_up(x, m):
    return _cdiv(x, m) * m


def _make_kernel(eps2, tr, lanes, acc_rows, full_rows, tail_cols, blocks_per_core):
    groups = tr // acc_rows

    def kernel(x_ref, y_ref, o_ref, acc_ref):
        c = pl.program_id(0)
        i = pl.program_id(1)
        gb = c * blocks_per_core + i  # true (unclamped) global block index

        @pl.when(i == 0)
        def _():
            acc_ref[...] = jnp.zeros_like(acc_ref)

        # Upcast after load: DMA stays in the input dtype, math in f32.
        d = x_ref[...].astype(jnp.float32) - y_ref[...].astype(jnp.float32)
        v = jnp.sqrt(d * d + jnp.float32(eps2))

        # Only blocks that can touch padding / out-of-range rows need the mask.
        needs_mask = (gb + 1) * tr > full_rows

        @pl.when(jnp.logical_not(needs_mask))
        def _():
            # Pure-VPU sublane-group tree add into the small accumulator.
            acc_ref[...] += v.reshape(groups, acc_rows, lanes).sum(axis=0)

        @pl.when(needs_mask)
        def _():
            # Row/col-based mask (no flat element index -> no int32 overflow).
            row = gb * tr + lax.broadcasted_iota(jnp.int32, (tr, lanes), 0)
            col = lax.broadcasted_iota(jnp.int32, (tr, lanes), 1)
            valid = (row < full_rows) | ((row == full_rows) & (col < tail_cols))
            vm = jnp.where(valid, v, jnp.float32(0.0))
            acc_ref[...] += vm.reshape(groups, acc_rows, lanes).sum(axis=0)

        @pl.when(i == pl.num_programs(1) - 1)
        def _():
            # Single small XLU reduce per core; division by N happens outside.
            o_ref[...] = jnp.sum(acc_ref[...]).reshape(1, 1)

    return kernel


def charbonnier_loss(x, y, epsilon=1e-3):
    """Pallas TPU implementation of mean(sqrt((x - y)^2 + eps^2))."""
    assert x.shape == y.shape, (x.shape, y.shape)
    n = int(x.size)
    eps2 = float(epsilon) ** 2

    # Stream narrow float dtypes directly; widen only non-float / f64 inputs.
    # (Note: f64 is silently narrowed to f32, matching typical TPU behavior.)
    def _as_kernel_dtype(a):
        if not jnp.issubdtype(a.dtype, jnp.floating) or a.dtype == jnp.float64:
            return a.astype(jnp.float32)
        return a

    x = _as_kernel_dtype(x)
    y = _as_kernel_dtype(y)
    if x.dtype != y.dtype:
        x = x.astype(jnp.float32)
        y = y.astype(jnp.float32)

    lanes = LANES
    rows = _cdiv(n, lanes)
    n_lane_pad = rows * lanes

    xf = x.reshape(-1)
    yf = y.reshape(-1)
    if n_lane_pad != n:
        # Pad only up to a multiple of `lanes` (at most 511 elements); the
        # common case (n % 512 == 0) takes the copy-free reshape-only path.
        xf = jnp.pad(xf, (0, n_lane_pad - n))
        yf = jnp.pad(yf, (0, n_lane_pad - n))
    xf = xf.reshape(rows, lanes)
    yf = yf.reshape(rows, lanes)

    # Row tile: up to (2048, 512) = 4 MiB f32 (2 MiB bf16) per input per step.
    if rows <= 8:
        tr = rows                       # block equals full dim (small inputs)
    else:
        tr = min(2048, _round_up(rows, 8))
    acc_rows = min(8, tr)

    nb = _cdiv(rows, tr)                # number of row blocks
    num_cores = 2 if nb >= 2 else 1     # v7x: split reduction over both TCs
    bpc = _cdiv(nb, num_cores)          # blocks per core

    full_rows = n // lanes              # fully-valid rows
    tail_cols = n % lanes               # valid lanes of the single partial row

    def in_map(c, i):
        # Clamp so an uneven core split never requests an out-of-range block;
        # the in-kernel mask zeroes that block's contribution anyway.
        return (jnp.minimum(c * bpc + i, nb - 1), 0)

    kernel = _make_kernel(eps2, tr, lanes, acc_rows, full_rows, tail_cols, bpc)

    itemsize = xf.dtype.itemsize
    cost = pl.CostEstimate(
        flops=4 * n,
        transcendentals=n,
        bytes_accessed=2 * n * itemsize + 4 * num_cores,
    )

    out = pl.pallas_call(
        kernel,
        out_shape=jax.ShapeDtypeStruct((num_cores, 1), jnp.float32),
        grid_spec=pltpu.PrefetchScalarGridSpec(
            num_scalar_prefetch=0,
            grid=(num_cores, bpc),
            in_specs=[
                pl.BlockSpec((tr, lanes), in_map),
                pl.BlockSpec((tr, lanes), in_map),
            ],
            out_specs=pl.BlockSpec((1, 1), lambda c, i: (c, 0)),
            scratch_shapes=[pltpu.VMEM((acc_rows, lanes), jnp.float32)],
        ),
        compiler_params=pltpu.CompilerParams(
            dimension_semantics=("parallel", "arbitrary"),
            vmem_limit_bytes=48 * 1024 * 1024,
        ),
        cost_estimate=cost,
    )(xf, yf)

    return jnp.sum(out) / jnp.float32(n)


def _reference(x, y, epsilon=1e-3):
    d = x.astype(jnp.float32) - y.astype(jnp.float32)
    return jnp.mean(jnp.sqrt(d * d + jnp.float32(epsilon) ** 2))


if __name__ == "__main__":
    key = jax.random.PRNGKey(0)
    k1, k2, k3, k4 = jax.random.split(key, 4)

    # Main test: shape implied by the module (image-like), n % 512 == 0 path.
    shape = (2, 4, 16, 16)
    x = jax.random.normal(k1, shape, jnp.float32)
    y = jax.random.normal(k2, shape, jnp.float32)

    loss = jax.block_until_ready(charbonnier_loss(x, y, epsilon=1e-3))
    ref = _reference(x, y, epsilon=1e-3)
    assert loss.shape == (), loss.shape
    assert bool(jnp.isfinite(loss))
    assert abs(float(loss) - float(ref)) < 1e-4, (float(loss), float(ref))

    # Ragged-size test: exercises the pad-to-512 + masked-tail path.
    shape2 = (2, 3, 9, 11)  # 594 elements, not a multiple of 512
    x2 = jax.random.normal(k3, shape2, jnp.float32)
    y2 = jax.random.normal(k4, shape2, jnp.float32)
    loss2 = jax.block_until_ready(charbonnier_loss(x2, y2, epsilon=1e-3))
    ref2 = _reference(x2, y2, epsilon=1e-3)
    assert abs(float(loss2) - float(ref2)) < 1e-4, (float(loss2), float(ref2))

    print("KERNEL_OK")
</pallas_src>

<mosaic_0001>
module attributes {stable_mosaic.version = 11 : i64} {
  func.func @kernel(%arg0: i32, %arg1: i32, %arg2: memref<4x512xf32, #tpu.memory_space<vmem>>, %arg3: memref<4x512xf32, #tpu.memory_space<vmem>>, %arg4: memref<1x1xf32, #tpu.memory_space<vmem>>, %arg5: memref<4x512xf32, #tpu.memory_space<vmem>>) attributes {dimension_semantics = [#tpu.dimension_semantics<parallel>, #tpu.dimension_semantics<arbitrary>], iteration_bounds = array<i64: 1, 1>, scalar_prefetch = 0 : i64, scratch_operands = 1 : i64, tpu.core_type = #tpu.core_type<tc>, window_params = [{transform_indices = @transform_0, window_bounds = array<i64: 4, 512>}, {transform_indices = @transform_1, window_bounds = array<i64: 4, 512>}, {transform_indices = @transform_2, window_bounds = array<i64: 1, 1>}]} {
    %c1_i32 = arith.constant 1 : i32
    %0 = arith.muli %arg0, %c1_i32 : i32
    %1 = arith.addi %0, %arg1 : i32
    %c0_i32 = arith.constant 0 : i32
    %2 = arith.cmpi eq, %arg1, %c0_i32 : i32
    %3 = arith.extui %2 : i1 to i32
    %c0_i32_0 = arith.constant 0 : i32
    %4 = arith.cmpi ne, %3, %c0_i32_0 : i32
    scf.if %4 {
      %cst_10 = arith.constant 0.000000e+00 : f32
      %23 = vector.broadcast %cst_10 : f32 to vector<4x512xf32>
      %c0_11 = arith.constant 0 : index
      %c0_12 = arith.constant 0 : index
      %24 = vector.load %arg5[%c0_11, %c0_12] : memref<4x512xf32, #tpu.memory_space<vmem>>, vector<4x512xf32>
      tpu.vector_store %arg5[%c0_11, %c0_12], %23 {strides = array<i32>} : memref<4x512xf32, #tpu.memory_space<vmem>>, vector<4x512xf32>,
    } else {
    }
    %c0 = arith.constant 0 : index
    %c0_1 = arith.constant 0 : index
    %5 = vector.load %arg2[%c0, %c0_1] : memref<4x512xf32, #tpu.memory_space<vmem>>, vector<4x512xf32>
    %c0_2 = arith.constant 0 : index
    %c0_3 = arith.constant 0 : index
    %6 = vector.load %arg3[%c0_2, %c0_3] : memref<4x512xf32, #tpu.memory_space<vmem>>, vector<4x512xf32>
    %7 = arith.subf %5, %6 : vector<4x512xf32>
    %8 = arith.mulf %7, %7 : vector<4x512xf32>
    %cst = arith.constant 9.99999997E-7 : f32
    %9 = vector.broadcast %cst : f32 to vector<4x512xf32>
    %10 = arith.addf %8, %9 : vector<4x512xf32>
    %11 = math.sqrt %10 : vector<4x512xf32>
    %c1_i32_4 = arith.constant 1 : i32
    %12 = arith.addi %1, %c1_i32_4 : i32
    %c4_i32 = arith.constant 4 : i32
    %13 = arith.muli %12, %c4_i32 : i32
    %c4_i32_5 = arith.constant 4 : i32
    %14 = arith.cmpi sgt, %13, %c4_i32_5 : i32
    %true = arith.constant true
    %15 = arith.xori %14, %true : i1
    %16 = arith.extui %15 : i1 to i32
    %c0_i32_6 = arith.constant 0 : i32
    %17 = arith.cmpi ne, %16, %c0_i32_6 : i32
    scf.if %17 {
      %c0_10 = arith.constant 0 : index
      %c0_11 = arith.constant 0 : index
      %23 = vector.load %arg5[%c0_10, %c0_11] : memref<4x512xf32, #tpu.memory_space<vmem>>, vector<4x512xf32>
      %24 = vector.shape_cast %11 : vector<4x512xf32> to vector<1x4x512xf32>
      %cst_12 = arith.constant dense<0.000000e+00> : vector<4x512xf32>
      %25 = vector.multi_reduction <add>, %24, %cst_12 [0] : vector<1x4x512xf32> to vector<4x512xf32>
      %26 = arith.addf %23, %25 : vector<4x512xf32>
      %c0_13 = arith.constant 0 : index
      %c0_14 = arith.constant 0 : index
      %27 = vector.load %arg5[%c0_13, %c0_14] : memref<4x512xf32, #tpu.memory_space<vmem>>, vector<4x512xf32>
      tpu.vector_store %arg5[%c0_13, %c0_14], %26 {strides = array<i32>} : memref<4x512xf32, #tpu.memory_space<vmem>>, vector<4x512xf32>,
    } else {
    }
    %18 = arith.extui %14 : i1 to i32
    %c0_i32_7 = arith.constant 0 : i32
    %19 = arith.cmpi ne, %18, %c0_i32_7 : i32
    scf.if %19 {
      %c4_i32_10 = arith.constant 4 : i32
      %23 = arith.muli %1, %c4_i32_10 : i32
      %24 = tpu.iota {dimensions = array<i32: 0>} : vector<4x512xi32>
      %25 = vector.broadcast %23 : i32 to vector<4x512xi32>
      %26 = arith.addi %25, %24 : vector<4x512xi32>
      %27 = tpu.iota {dimensions = array<i32: 1>} : vector<4x512xi32>
      %c4_i32_11 = arith.constant 4 : i32
      %28 = vector.broadcast %c4_i32_11 : i32 to vector<4x512xi32>
      %29 = arith.cmpi slt, %26, %28 : vector<4x512xi32>
      %c4_i32_12 = arith.constant 4 : i32
      %30 = vector.broadcast %c4_i32_12 : i32 to vector<4x512xi32>
      %31 = arith.cmpi eq, %26, %30 : vector<4x512xi32>
      %c0_i32_13 = arith.constant 0 : i32
      %32 = vector.broadcast %c0_i32_13 : i32 to vector<4x512xi32>
      %33 = arith.cmpi slt, %27, %32 : vector<4x512xi32>
      %34 = arith.andi %31, %33 : vector<4x512xi1>
      %35 = arith.ori %29, %34 : vector<4x512xi1>
      %cst_14 = arith.constant 0.000000e+00 : f32
      %36 = vector.broadcast %cst_14 : f32 to vector<4x512xf32>
      %37 = arith.select %35, %11, %36 : vector<4x512xi1>, vector<4x512xf32>
      %c0_15 = arith.constant 0 : index
      %c0_16 = arith.constant 0 : index
      %38 = vector.load %arg5[%c0_15, %c0_16] : memref<4x512xf32, #tpu.memory_space<vmem>>, vector<4x512xf32>
      %39 = vector.shape_cast %37 : vector<4x512xf32> to vector<1x4x512xf32>
      %cst_17 = arith.constant dense<0.000000e+00> : vector<4x512xf32>
      %40 = vector.multi_reduction <add>, %39, %cst_17 [0] : vector<1x4x512xf32> to vector<4x512xf32>
      %41 = arith.addf %38, %40 : vector<4x512xf32>
      %c0_18 = arith.constant 0 : index
      %c0_19 = arith.constant 0 : index
      %42 = vector.load %arg5[%c0_18, %c0_19] : memref<4x512xf32, #tpu.memory_space<vmem>>, vector<4x512xf32>
      tpu.vector_store %arg5[%c0_18, %c0_19], %41 {strides = array<i32>} : memref<4x512xf32, #tpu.memory_space<vmem>>, vector<4x512xf32>,
    } else {
    }
    %c0_i32_8 = arith.constant 0 : i32
    %20 = arith.cmpi eq, %arg1, %c0_i32_8 : i32
    %21 = arith.extui %20 : i1 to i32
    %c0_i32_9 = arith.constant 0 : i32
    %22 = arith.cmpi ne, %21, %c0_i32_9 : i32
    scf.if %22 {
      %c0_10 = arith.constant 0 : index
      %c0_11 = arith.constant 0 : index
      %23 = vector.load %arg5[%c0_10, %c0_11] : memref<4x512xf32, #tpu.memory_space<vmem>>, vector<4x512xf32>
      %24 = vector.shape_cast %23 : vector<4x512xf32> to vector<1x4x512xf32>
      %cst_12 = arith.constant dense<0.000000e+00> : vector<1xf32>
      %25 = vector.multi_reduction <add>, %24, %cst_12 [1, 2] : vector<1x4x512xf32> to vector<1xf32>
      %26 = vector.shape_cast %25 : vector<1xf32> to vector<1x1x1xf32>
      %27 = vector.extract %26[0, 0, 0] : f32 from vector<1x1x1xf32>
      %28 = vector.broadcast %27 : f32 to vector<1x1xf32>
      %c0_13 = arith.constant 0 : index
      %c0_14 = arith.constant 0 : index
      %29 = vector.load %arg4[%c0_13, %c0_14] : memref<1x1xf32, #tpu.memory_space<vmem>>, vector<1x1xf32>
      tpu.vector_store %arg4[%c0_13, %c0_14], %28 {strides = array<i32>} : memref<1x1xf32, #tpu.memory_space<vmem>>, vector<1x1xf32>,
    } else {
    }
    return
  }
  func.func @transform_0(%arg0: i32, %arg1: i32) -> (i32, i32) {
    %c1_i32 = arith.constant 1 : i32
    %0 = arith.muli %arg0, %c1_i32 : i32
    %1 = arith.addi %0, %arg1 : i32
    %c0_i32 = arith.constant 0 : i32
    %2 = arith.minsi %1, %c0_i32 : i32
    %c0_i32_0 = arith.constant 0 : i32
    %c0_i32_1 = arith.constant 0 : i32
    return %2, %c0_i32_0 : i32, i32
  }
  func.func @transform_1(%arg0: i32, %arg1: i32) -> (i32, i32) {
    %c1_i32 = arith.constant 1 : i32
    %0 = arith.muli %arg0, %c1_i32 : i32
    %1 = arith.addi %0, %arg1 : i32
    %c0_i32 = arith.constant 0 : i32
    %2 = arith.minsi %1, %c0_i32 : i32
    %c0_i32_0 = arith.constant 0 : i32
    %c0_i32_1 = arith.constant 0 : i32
    return %2, %c0_i32_0 : i32, i32
  }
  func.func @transform_2(%arg0: i32, %arg1: i32) -> (i32, i32) {
    %c0_i32 = arith.constant 0 : i32
    %c0_i32_0 = arith.constant 0 : i32
    return %arg0, %c0_i32 : i32, i32
  }
}

</mosaic_0001>

<llo_original>
// kernel: tpu_custom_call.1
$region0: #{tpu_custom_call.1}
  #allocation0 [shape = 'u32[]', space=smem, size = 0x4, offset = 0x4, fixed_abs, tag = 'smem constant byte address 0x4 - core index']
  #allocation1 [shape = 'u32[72,128]{1,0:T(1,128)}', space=vmem, size = 0x9000, scoped, tag = 'internal scratch']
  #allocation2 [shape = 'f32[4,512]{1,0:T(4,128)}', space=vmem, size = 0x2000, scoped, tag = 'scratch operand']
  %s0 = inlined_call_operand.hbm [shape: f32[4,512], index: 0, kind: input, shape index: {}]
  %s1 = inlined_call_operand.hbm [shape: f32[4,512], index: 1, kind: input, shape index: {}]
  %s2 = inlined_call_operand.hbm [shape: f32[1,1], index: 2, kind: output, shape index: {}]
  %s3 = sld [smem:[#allocation0]]
  $region42: #{tpu_custom_call.1} parent=0
    _
  %s5 = ssub.s32 1, %s3
  %s6 = scalar_select 0, %s5, %s3
  $region1: #{tpu_custom_call.1} parent=0
    #allocation3 [shape = 'u8[8192]{0}', space=vmem, size = 0x2000, scoped, tag = 'input window, operand 0, single buffered']
    #allocation4 [shape = 's32[1]{0}', space=sflag, size = 0x4, scoped, tag = 'scoped memory for tpu_custom_call.1']
    #allocation5 [shape = 's32[1]{0}', space=sflag, size = 0x4, scoped, tag = 'scoped memory for tpu_custom_call.1']
    #allocation6 [shape = 'u8[8192]{0}', space=vmem, size = 0x2000, scoped, tag = 'input window, operand 1, single buffered']
    #allocation7 [shape = 's32[1]{0}', space=sflag, size = 0x4, scoped, tag = 'scoped memory for tpu_custom_call.1']
    #allocation8 [shape = 'u8[512]{0}', space=vmem, size = 0x400, scoped, tag = 'output window, operand 0, single buffered']
    %7 = vsyncpa [#allocation4], 0
    %8 = vsyncpa [#allocation7], 0
    %9 = vsyncpa [#allocation5], 0
    // Predicated region
    $region2: #{tpu_custom_call.1} parent=1 // pred_check
      _
    $region3: #{tpu_custom_call.1} parent=1 // pred_check_branch
      %11 = sbr.rel (0) target = $region5
    $region4: #{tpu_custom_call.1} parent=1 // pred_region
      %s12 = sadd.s32 0, 0
      %p13 = scmp.lt.s32.totalorder %s12, 0
      %s14 = scalar_select %p13, %s12, 0
      %16 = vsyncadd [#allocation4], 0
      %s17 = smul.addr %s14, 4
      %s18 = smul.addr %s17, 4
      %s19 = scalar_lea.hbm %s0, %s18
      %s21 = sshll.u32 %s19, 4
      %s22 = int_to_ptr.hbm [resolvable:$true] %s21
      %s23 = sshll.u32 [#allocation3], 4
      %s24 = int_to_ptr.vmem [resolvable:$true] %s23
      %26 = dma.hbm_to_vmem [thread:$0]  %s22, 256, %s24, [#allocation4]
    $region5: #{tpu_custom_call.1} parent=1 // pred_fallthru
      _
    // Predicated region
    $region6: #{tpu_custom_call.1} parent=1 // pred_check
      _
    $region7: #{tpu_custom_call.1} parent=1 // pred_check_branch
      %28 = sbr.rel (0) target = $region9
    $region8: #{tpu_custom_call.1} parent=1 // pred_region
      %s29 = sadd.s32 0, 0
      %p30 = scmp.lt.s32.totalorder %s29, 0
      %s31 = scalar_select %p30, %s29, 0
      %33 = vsyncadd [#allocation7], 0
      %s34 = smul.addr %s31, 4
      %s35 = smul.addr %s34, 4
      %s36 = scalar_lea.hbm %s1, %s35
      %s38 = sshll.u32 %s36, 4
      %s39 = int_to_ptr.hbm [resolvable:$true] %s38
      %s40 = sshll.u32 [#allocation6], 4
      %s41 = int_to_ptr.vmem [resolvable:$true] %s40
      %43 = dma.hbm_to_vmem [thread:$0]  %s39, 256, %s41, [#allocation7]
    $region9: #{tpu_custom_call.1} parent=1 // pred_fallthru
      _
    // Predicated region
    $region10: #{tpu_custom_call.1} parent=1 // pred_check
      _
    $region11: #{tpu_custom_call.1} parent=1 // pred_check_branch
      %45 = sbr.rel (0) target = $region13
    $region12: #{tpu_custom_call.1} parent=1 // pred_region
      %47 = dma.done [#allocation4], 256
    $region13: #{tpu_custom_call.1} parent=1 // pred_fallthru
      _
    // Predicated region
    $region14: #{tpu_custom_call.1} parent=1 // pred_check
      _
    $region15: #{tpu_custom_call.1} parent=1 // pred_check_branch
      %49 = sbr.rel (0) target = $region17
    $region16: #{tpu_custom_call.1} parent=1 // pred_region
      %51 = dma.done [#allocation7], 256
    $region17: #{tpu_custom_call.1} parent=1 // pred_fallthru
      _
    %s52 = sadd.s32 0, 0
    %p53 = scmp.lt.s32.totalorder %s52, 0
    %s54 = scalar_select %p53, %s52, 0
    %s55 = sadd.s32 0, 0
    %p56 = scmp.lt.s32.totalorder %s55, 0
    %s57 = scalar_select %p56, %s55, 0
    %s58 = sadd.s32 0, 0
    %p59 = scmp.eq.s32.totalorder 0, 0
    // Predicated region
    $region18: #{tpu_custom_call.1} parent=1 // pred_check
      %p60 = pneg %p59
    $region19: #{tpu_custom_call.1} parent=1 // pred_check_branch
      %62 = sbr.rel (%p60) target = $region21
    $region20: #{tpu_custom_call.1} parent=1 // pred_region
      %63 = vst [vmem:[#allocation2] sm:$0xff] 0.0
      %64 = vst [vmem:[#allocation2 + $0x8] sm:$0xff] 0.0
    $region21: #{tpu_custom_call.1} parent=1 // pred_fallthru
      _
    %v65 = vld [vmem:[#allocation3] sm:$0xff]
    %v66 = vld [vmem:[#allocation3 + $0x8] sm:$0xff]
    %v67 = vld [vmem:[#allocation6] sm:$0xff]
    %v68 = vld [vmem:[#allocation6 + $0x8] sm:$0xff]
    %v69 = vsub.f32 %v65, %v67
    %v70 = vsub.f32 %v66, %v68
    %v71 = vmul.f32 %v69, %v69
    %v72 = vmul.f32 %v70, %v70
    %v73 = vadd.f32 %v71, 1e-06
    %v74 = vadd.f32 %v72, 1e-06
    %v75 = vrsqrt.pop %v73
    %v76 = vmul.f32 %v75, %v73
    %v77 = vmul.f32 %v76, %v75
    %v78 = vmul.f32 0.5, %v77
    %v79 = vsub.f32 1.5, %v78
    %v80 = vmul.f32 %v75, %v79
    %v81 = vmul.f32 %v73, %v80
    %vm82 = vcmp.eq.f32.partialorder %v73, inf
    %v83 = vsel %vm82, %v73, %v81
    %vm84 = vcmp.eq.f32.partialorder %v73, 0.0
    %v85 = vand.u32 %v73, 2147483648
    %v86 = vsel %vm84, %v85, %v83
    %v87 = vrsqrt.pop %v74
    %v88 = vmul.f32 %v87, %v74
    %v89 = vmul.f32 %v88, %v87
    %v90 = vmul.f32 0.5, %v89
    %v91 = vsub.f32 1.5, %v90
    %v92 = vmul.f32 %v87, %v91
    %v93 = vmul.f32 %v74, %v92
    %vm94 = vcmp.eq.f32.partialorder %v74, inf
    %v95 = vsel %vm94, %v74, %v93
    %vm96 = vcmp.eq.f32.partialorder %v74, 0.0
    %v97 = vand.u32 %v74, 2147483648
    %v98 = vsel %vm96, %v97, %v95
    %s99 = sadd.s32 %s58, 1
    %s100 = smul.u32 %s99, 4
    %p101 = scmp.gt.s32.totalorder %s100, 4
    %p102 = scmp.le.s32.totalorder %s100, 4
    // Predicated region
    $region22: #{tpu_custom_call.1} parent=1 // pred_check
      %p103 = pneg %p102
    $region23: #{tpu_custom_call.1} parent=1 // pred_check_branch
      %105 = sbr.rel (%p103) target = $region25
    $region24: #{tpu_custom_call.1} parent=1 // pred_region
      %v106 = vld [vmem:[#allocation2] sm:$0xff]
      %v107 = vld [vmem:[#allocation2 + $0x8] sm:$0xff]
      %v108 = vadd.f32 %v86, 0.0
      %v109 = vadd.f32 %v98, 0.0
      %v110 = vadd.f32 %v106, %v108
      %v111 = vadd.f32 %v107, %v109
      %112 = vst [vmem:[#allocation2] sm:$0xff] %v110
      %113 = vst [vmem:[#allocation2 + $0x8] sm:$0xff] %v111
    $region25: #{tpu_custom_call.1} parent=1 // pred_fallthru
      _
    // Predicated region
    $region26: #{tpu_custom_call.1} parent=1 // pred_check
      %p114 = pneg %p101
    $region27: #{tpu_custom_call.1} parent=1 // pred_check_branch
      %116 = sbr.rel (%p114) target = $region29
    $region28: #{tpu_custom_call.1} parent=1 // pred_region
      %s117 = smul.u32 %s58, 4
      %v118 = vlaneseq
      %v119 = vshrl.u32 %v118, 7
      %v120 = vstv %s117
      %v121 = vadd.s32 %v120, %v119
      %v122 = vlaneseq
      %v123 = vand.u32 %v122, 127
      %v124 = vadd.s32 %v123, 128
      %v125 = vadd.s32 %v123, 256
      %v126 = vadd.s32 %v123, 384
      %vm127 = vcmp.lt.s32.totalorder %v121, 4
      %vm128 = vcmp.eq.s32.totalorder %v121, 4
      %vm129 = vcmp.lt.s32.totalorder %v123, 0
      %vm130 = vcmp.lt.s32.totalorder %v124, 0
      %vm131 = vcmp.lt.s32.totalorder %v125, 0
      %vm132 = vcmp.lt.s32.totalorder %v126, 0
      %vm133 = vmand %vm128, %vm129
      %vm134 = vmand %vm128, %vm130
      %vm135 = vmand %vm128, %vm131
      %vm136 = vmand %vm128, %vm132
      %vm137 = vmor %vm127, %vm133
      %vm138 = vmor %vm127, %vm134
      %vm139 = vmor %vm127, %vm135
      %vm140 = vmor %vm127, %vm136
      %143 = vst [vmem:[#allocation1] ss:$2 sm:$0xff] %v86
      %s144 = scalar_lea.vmem [#allocation1], 16
      %145 = vst [vmem:[%s144] ss:$2 sm:$0xff] %v98
      %v146 = vld.sshfl [vmem:[#allocation1] sm:$0xff pattern:$0x75316420]
      %v147 = vld.sshfl [vmem:[#allocation1 + $0x8] sm:$0xff pattern:$0x75316420]
      %v148 = vld.sshfl [vmem:[#allocation1 + $0x10] sm:$0xff pattern:$0x75316420]
      %v149 = vld.sshfl [vmem:[#allocation1 + $0x18] sm:$0xff pattern:$0x75316420]
      %v154 = vsel %vm137, %v146, 0.0
      %v155 = vsel %vm138, %v147, 0.0
      %v156 = vsel %vm139, %v148, 0.0
      %v157 = vsel %vm140, %v149, 0.0
      %v158 = vld [vmem:[#allocation2] sm:$0xff]
      %v159 = vld [vmem:[#allocation2 + $0x8] sm:$0xff]
      %v160 = vadd.f32 %v154, 0.0
      %v161 = vadd.f32 %v155, 0.0
      %v162 = vadd.f32 %v156, 0.0
      %v163 = vadd.f32 %v157, 0.0
      %v168 = vrot.slane %v161, 4
      %v169 = vrot.slane %v163, 4
      %vm170 = vcmask 1043456
      %v171 = vsel %vm170, %v160, %v168
      %v172 = vsel %vm170, %v162, %v169
      %v175 = vadd.f32 %v158, %v171
      %v176 = vadd.f32 %v159, %v172
      %177 = vst [vmem:[#allocation2] sm:$0xff] %v175
      %178 = vst [vmem:[#allocation2 + $0x8] sm:$0xff] %v176
    $region29: #{tpu_custom_call.1} parent=1 // pred_fallthru
      _
    // Predicated region
    $region30: #{tpu_custom_call.1} parent=1 // pred_check
      %p179 = pneg %p59
    $region31: #{tpu_custom_call.1} parent=1 // pred_check_branch
      %181 = sbr.rel (%p179) target = $region33
    $region32: #{tpu_custom_call.1} parent=1 // pred_region
      %v182 = vld [vmem:[#allocation2] sm:$0xff]
      %v183 = vld [vmem:[#allocation2 + $0x8] sm:$0xff]
      %186 = vst [vmem:[#allocation1] ss:$2 sm:$0xff] %v182
      %s187 = scalar_lea.vmem [#allocation1], 16
      %188 = vst [vmem:[%s187] ss:$2 sm:$0xff] %v183
      %v189 = vld.sshfl [vmem:[#allocation1] sm:$0xff pattern:$0x75316420]
      %v190 = vld.sshfl [vmem:[#allocation1 + $0x8] sm:$0xff pattern:$0x75316420]
      %v191 = vld.sshfl [vmem:[#allocation1 + $0x10] sm:$0xff pattern:$0x75316420]
      %v192 = vld.sshfl [vmem:[#allocation1 + $0x18] sm:$0xff pattern:$0x75316420]
      %vm197 = vcmask 1043456
      %v198 = vsel %vm197, %v189, 0.0
      %v199 = vsel %vm197, %v190, 0.0
      %v200 = vadd.f32 %v198, %v199
      %v201 = vsel %vm197, %v191, 0.0
      %v202 = vadd.f32 %v200, %v201
      %v203 = vsel %vm197, %v192, 0.0
      %v204 = vadd.f32 %v202, %v203
      %205 = vadd.xlane.f32.xlu0 %v204
      %v206 = vpop.xlane.xlu0 %205
      %v207 = vrot.slane %v206, 4
      %v208 = vadd.f32 %v206, %v207
      %v209 = vrot.slane %v208, 2
      %v210 = vadd.f32 %v208, %v209
      %v211 = vrot.slane %v210, 1
      %v212 = vadd.f32 %v210, %v211
      %s213 = vtos %v212
      %v214 = vstv %s213
      %vm215 = vcmask 0
      %216 = vst.msk [vmem:[#allocation8] sm:$0x1] %vm215, %v214
    $region33: #{tpu_custom_call.1} parent=1 // pred_fallthru
      _
    // Predicated region
    $region34: #{tpu_custom_call.1} parent=1 // pred_check
      _
    $region35: #{tpu_custom_call.1} parent=1 // pred_check_branch
      %218 = sbr.rel (0) target = $region37
    $region36: #{tpu_custom_call.1} parent=1 // pred_region
      %220 = vsyncadd [#allocation5], 0
      %s222 = sshll.u32 [#allocation8], 4
      %s223 = int_to_ptr.vmem [resolvable:$true] %s222
      %s224 = sshll.u32 %s2, 4
      %s225 = int_to_ptr.hbm [resolvable:$true] %s224
      %227 = dma.vmem_to_hbm [thread:$0]  %s223, 16, %s225, [#allocation5]
    $region37: #{tpu_custom_call.1} parent=1 // pred_fallthru
      _
    // Predicated region
    $region38: #{tpu_custom_call.1} parent=1 // pred_check
      _
    $region39: #{tpu_custom_call.1} parent=1 // pred_check_branch
      %229 = sbr.rel (0) target = $region41
    $region40: #{tpu_custom_call.1} parent=1 // pred_region
      %231 = dma.done [#allocation5], 16
    $region41: #{tpu_custom_call.1} parent=1 // pred_fallthru
      _
    %232 = vsyncpa [#allocation4], 1
    %233 = vsyncpa [#allocation7], 1
    %234 = vsyncpa [#allocation5], 1

</llo_original>
